<compile_context>
chip_gen: v7x
topology: tpu7x:2x2x1
jax: 0.10.0
libtpu: 0.0.40
codegen_flags: <defaults>
</compile_context>

<pallas_src>
import jax
import jax.numpy as jnp
from jax.experimental import pallas as pl
from jax.experimental.pallas import tpu as pltpu


# ----------------------------------------------------------------------------
# Helpers
# ----------------------------------------------------------------------------
def _round_up(v, m):
    return (v + m - 1) // m * m


def _pick_batch_tile(batch: int) -> int:
    """Sublane-aligned batch tile; prefer >=2 tiles so v7x's 2 TCs both work."""
    if batch <= 8:
        return batch  # block dim == full array dim is always legal
    candidates = (256, 128, 64, 32, 16, 8)
    for tb in candidates:          # aligned AND at least two tiles
        if batch % tb == 0 and batch // tb >= 2:
            return tb
    for tb in candidates:          # aligned, single tile
        if batch % tb == 0:
            return tb
    return batch                   # fall back: one full-batch tile


def _pick_time_chunk(T: int, tb: int, hp: int, n_streams: int,
                     budget_bytes: int = 8 << 20) -> int:
    """Largest divisor of T (<=32) whose double-buffered blocks fit a budget."""
    best = 1
    for tc in range(1, min(T, 32) + 1):
        if T % tc != 0:
            continue
        # per stream: in block + out block, each double-buffered, f32
        if n_streams * 4 * tc * tb * hp * 4 <= budget_bytes:
            best = tc
    return best


def _prepare_weights(weight_input, weight_recurrent, bias):
    """Transpose, fold the two biases, and zero-pad H up to a 128 multiple."""
    H = weight_input.shape[-2]
    Hp = _round_up(H, 128)
    w_ih_t = jnp.transpose(weight_input[0]).astype(jnp.float32)      # [I, H]
    w_hh_t = jnp.transpose(weight_recurrent[0]).astype(jnp.float32)  # [H, H]
    b = (bias[0, :H] + bias[0, H:]).astype(jnp.float32)              # [H]
    if Hp != H:
        pad = Hp - H
        w_ih_t = jnp.pad(w_ih_t, ((0, 0), (0, pad)))
        w_hh_t = jnp.pad(w_hh_t, ((0, pad), (0, pad)))
        b = jnp.pad(b, (0, pad))
    return w_ih_t, w_hh_t, b, H, Hp


def _input_projection(x, w_ih_t_padded, b_padded, matmul_dtype):
    """Time-parallel x @ W_ih^T + b for all T in one big XLA matmul (f32 out)."""
    pre = jnp.einsum(
        "tbi,ih->tbh",
        x.astype(matmul_dtype),
        w_ih_t_padded.astype(matmul_dtype),
        preferred_element_type=jnp.float32,
    )
    return pre + b_padded.astype(jnp.float32)


# ----------------------------------------------------------------------------
# Pallas kernel: serial recurrence h <- tanh(h @ W_hh^T + pre_x[t])
# ----------------------------------------------------------------------------
def _make_kernel(n_streams: int, tc: int, store_all: bool, mm_dtype):
    def kernel(*refs):
        # refs = px_0..px_{n-1}, whh, out_0..out_{n-1}, h_0..h_{n-1}
        px_refs = refs[:n_streams]
        whh_ref = refs[n_streams]
        out_refs = refs[n_streams + 1: 2 * n_streams + 1]
        h_refs = refs[2 * n_streams + 1:]

        ti = pl.program_id(1)

        # Zero the hidden-state carry at the start of every sequence
        # (re-zeroed automatically whenever the batch tile changes, since the
        # time axis is the inner grid axis).
        @pl.when(ti == 0)
        def _():
            for h_ref in h_refs:
                h_ref[...] = jnp.zeros_like(h_ref)

        w = whh_ref[...]  # hoisted: one VMEM load per grid step

        # Fully-unrolled chunk of Tc sequential timesteps.
        for tau in range(tc):
            for s in range(n_streams):
                pre = (
                    jnp.dot(h_refs[s][...].astype(mm_dtype), w,
                            preferred_element_type=jnp.float32)
                    + px_refs[s][tau]
                )
                h_new = jnp.tanh(pre)          # f32 elementwise (v5e-safe)
                h_refs[s][...] = h_new
                if store_all:
                    out_refs[s][tau] = h_new.astype(out_refs[s].dtype)

        if not store_all:
            # Last-hidden-only path: output block has a constant time index,
            # so HBM writeback happens once per batch tile, not T times.
            for s in range(n_streams):
                out_refs[s][0] = h_refs[s][...].astype(out_refs[s].dtype)

    return kernel


def _rnn_scan(pre_x_list, w_hh_mm, out_dtype, output_index, mm_dtype):
    """Run the recurrent scan over one or more independent activation streams."""
    n = len(pre_x_list)
    T, B, Hp = pre_x_list[0].shape
    tb = _pick_batch_tile(B)
    store_all = (output_index == 0)
    tc = _pick_time_chunk(T, tb, Hp, n)
    grid = (B // tb, T // tc)

    px_specs = [pl.BlockSpec((tc, tb, Hp), lambda bi, ti: (ti, bi, 0))
                for _ in range(n)]
    # W_hh^T: constant index_map -> stays VMEM-resident across the whole grid.
    # TODO(synk): on v7x, pipeline_mode=pl.Buffered(1) would drop the second
    # (useless) weight buffer and free Hp*Hp*itemsize bytes of VMEM.
    whh_spec = pl.BlockSpec((Hp, Hp), lambda bi, ti: (0, 0))
    in_specs = px_specs + [whh_spec]

    if store_all:
        out_specs = [pl.BlockSpec((tc, tb, Hp), lambda bi, ti: (ti, bi, 0))
                     for _ in range(n)]
        out_T = T
    else:
        out_specs = [pl.BlockSpec((1, tb, Hp), lambda bi, ti: (0, bi, 0))
                     for _ in range(n)]
        out_T = 1
    out_shapes = tuple(jax.ShapeDtypeStruct((out_T, B, Hp), out_dtype)
                       for _ in range(n))
    scratch = [pltpu.VMEM((tb, Hp), jnp.float32) for _ in range(n)]

    out_bytes = jnp.dtype(out_dtype).itemsize
    mm_bytes = jnp.dtype(mm_dtype).itemsize
    cost = pl.CostEstimate(
        flops=int(n * (2 * T * B * Hp * Hp + 2 * T * B * Hp)),
        transcendentals=int(n * T * B * Hp),
        bytes_accessed=int(n * (T * B * Hp * 4 + out_T * B * Hp * out_bytes)
                           + Hp * Hp * mm_bytes),
    )

    # Explicit VMEM budget (matters on v7x's 64 MiB / 32 MiB scoped default).
    est = (n * (2 * tc * tb * Hp * 4                # pre_x blocks, 2-buffered
                + 2 * (tc if store_all else 1) * tb * Hp * out_bytes
                + tb * Hp * 4)                      # hidden scratch
           + 2 * Hp * Hp * mm_bytes)                # resident weights
    vmem_limit = int(min(max(16 << 20, 2 * est + (4 << 20)), 48 << 20))

    outs = pl.pallas_call(
        _make_kernel(n, tc, store_all, mm_dtype),
        out_shape=out_shapes,
        grid_spec=pltpu.PrefetchScalarGridSpec(
            num_scalar_prefetch=0,
            grid=grid,
            in_specs=in_specs,
            out_specs=out_specs,
            scratch_shapes=scratch,
        ),
        compiler_params=pltpu.CompilerParams(
            dimension_semantics=("parallel", "arbitrary"),
            vmem_limit_bytes=vmem_limit,
        ),
        cost_estimate=cost,
    )(*pre_x_list, w_hh_mm)
    return list(outs)


# ----------------------------------------------------------------------------
# Public wrappers (BoundRNN.forward / interval_propagate semantics)
# ----------------------------------------------------------------------------
def bound_rnn_forward(x, weight_input, weight_recurrent, bias,
                      sequence_length=None, initial_h=None, output_index=0,
                      matmul_dtype=jnp.bfloat16):
    """Pallas implementation of BoundRNN.forward.

    x:                [T, B, input_size]
    weight_input:     [1, hidden_size, input_size]   (ONNX RNN layout)
    weight_recurrent: [1, hidden_size, hidden_size]
    bias:             [1, 2*hidden_size]              (b_ih ++ b_hh)
    Returns (primary_output, last_hidden). primary_output is the module's
    return value: all hidden states if output_index == 0 else the last hidden.
    """
    # TODO(synk): sequence_length is unused (the reference BoundRNNImpl also
    # ignores it); the module asserts initial_h == 0, so the kernel hard-codes
    # a zero initial hidden state.
    del sequence_length, initial_h

    w_ih_t, w_hh_t, b, H, Hp = _prepare_weights(weight_input,
                                                weight_recurrent, bias)
    # Feedback #1: all of the x-projection FLOPs run time-parallel, off the
    # serial critical chain.
    pre_x = _input_projection(x, w_ih_t, b, matmul_dtype)   # [T, B, Hp] f32
    w_hh_mm = w_hh_t.astype(matmul_dtype)

    outs = _rnn_scan([pre_x], w_hh_mm, x.dtype, output_index, matmul_dtype)

    if output_index == 0:
        outputs = outs[0][:, :, :H] if Hp != H else outs[0]
        return outputs, outputs[-1]
    last = outs[0][0, :, :H] if Hp != H else outs[0][0]
    return last, last


def bound_rnn_interval_propagate(h_L, h_U, weight_input, weight_recurrent,
                                 bias, output_index=0,
                                 matmul_dtype=jnp.bfloat16):
    """Bound.interval_propagate: (forward(h_L), forward(h_U)).

    Both bounds are processed in ONE pallas launch as two independent streams
    (separate inputs / outputs / hidden scratches) -- no HBM concatenate.
    """
    w_ih_t, w_hh_t, b, H, Hp = _prepare_weights(weight_input,
                                                weight_recurrent, bias)
    px_L = _input_projection(h_L, w_ih_t, b, matmul_dtype)
    px_U = _input_projection(h_U, w_ih_t, b, matmul_dtype)
    w_hh_mm = w_hh_t.astype(matmul_dtype)

    outs = _rnn_scan([px_L, px_U], w_hh_mm, h_L.dtype, output_index,
                     matmul_dtype)
    if output_index == 0:
        lo = outs[0][:, :, :H] if Hp != H else outs[0]
        hi = outs[1][:, :, :H] if Hp != H else outs[1]
        return lo, hi
    lo = outs[0][0, :, :H] if Hp != H else outs[0][0]
    hi = outs[1][0, :, :H] if Hp != H else outs[1][0]
    return lo, hi


# ----------------------------------------------------------------------------
# Pure-JAX reference (torch.nn.RNNCell with tanh, scanned over time)
# ----------------------------------------------------------------------------
def _rnn_reference(x, weight_input, weight_recurrent, bias,
                   matmul_dtype=jnp.float32):
    H = weight_input.shape[-2]
    w_ih_t = jnp.transpose(weight_input[0]).astype(matmul_dtype)   # [I, H]
    w_hh_t = jnp.transpose(weight_recurrent[0]).astype(matmul_dtype)
    b = (bias[0, :H] + bias[0, H:]).astype(jnp.float32)

    def step(h, x_t):
        pre = (jnp.dot(x_t.astype(matmul_dtype), w_ih_t,
                       preferred_element_type=jnp.float32)
               + jnp.dot(h.astype(matmul_dtype), w_hh_t,
                         preferred_element_type=jnp.float32)
               + b)
        h_new = jnp.tanh(pre)
        return h_new, h_new

    h0 = jnp.zeros((x.shape[1], H), jnp.float32)
    h_last, outs = jax.lax.scan(step, h0, x)
    return outs, h_last


# ----------------------------------------------------------------------------
# Test
# ----------------------------------------------------------------------------
if __name__ == "__main__":
    key = jax.random.PRNGKey(0)
    T, B, I, H = 8, 2, 16, 32  # seq=8, batch=2, input=16, hidden=32
    k0, k1, k2, k3 = jax.random.split(key, 4)

    x = jax.random.normal(k0, (T, B, I), dtype=jnp.float32)
    weight_input = 0.3 * jax.random.normal(k1, (1, H, I), dtype=jnp.float32)
    weight_recurrent = 0.3 * jax.random.normal(k2, (1, H, H), dtype=jnp.float32)
    bias = 0.1 * jax.random.normal(k3, (1, 2 * H), dtype=jnp.float32)
    initial_h = jnp.zeros((B, H), dtype=jnp.float32)
    seq_len = jnp.full((B,), T, jnp.int32)

    ref_out, ref_last = _rnn_reference(x, weight_input, weight_recurrent, bias,
                                       jnp.float32)

    # f32 MXU-operand path: tight tolerance against the pure-f32 reference.
    out_f32, last_f32 = bound_rnn_forward(
        x, weight_input, weight_recurrent, bias, seq_len, initial_h,
        output_index=0, matmul_dtype=jnp.float32)
    out_f32, last_f32 = jax.block_until_ready((out_f32, last_f32))
    assert out_f32.shape == (T, B, H) and last_f32.shape == (B, H)
    assert bool(jnp.allclose(out_f32, ref_out, atol=1e-4, rtol=1e-4)), \
        "f32 Pallas RNN outputs mismatch vs reference"
    assert bool(jnp.allclose(last_f32, ref_last, atol=1e-4, rtol=1e-4)), \
        "f32 Pallas RNN final hidden mismatch vs reference"

    # bf16 MXU-operand perf path: compare against a bf16-operand reference
    # (rounding compounds over T, so also sanity-check loosely vs pure f32).
    out_bf, _ = bound_rnn_forward(
        x, weight_input, weight_recurrent, bias, seq_len, initial_h,
        output_index=0, matmul_dtype=jnp.bfloat16)
    out_bf = jax.block_until_ready(out_bf)
    ref_out_bf, _ = _rnn_reference(x, weight_input, weight_recurrent, bias,
                                   jnp.bfloat16)
    assert bool(jnp.allclose(out_bf, ref_out_bf, atol=2e-2, rtol=2e-2)), \
        "bf16 Pallas RNN outputs mismatch vs bf16 reference"
    assert bool(jnp.allclose(out_bf, ref_out, atol=5e-2, rtol=5e-2)), \
        "bf16 Pallas RNN outputs too far from f32 reference"

    # Last-hidden-only output path (output_index != 0).
    last_only, _ = bound_rnn_forward(
        x, weight_input, weight_recurrent, bias, seq_len, initial_h,
        output_index=1, matmul_dtype=jnp.float32)
    last_only = jax.block_until_ready(last_only)
    assert last_only.shape == (B, H)
    assert bool(jnp.allclose(last_only, ref_last, atol=1e-4, rtol=1e-4)), \
        "last-hidden-only path mismatch vs reference"

    # interval_propagate: both bounds in one launch, no HBM concat.
    h_L, h_U = x - 0.1, x + 0.1
    lo, hi = bound_rnn_interval_propagate(
        h_L, h_U, weight_input, weight_recurrent, bias, output_index=0,
        matmul_dtype=jnp.float32)
    lo, hi = jax.block_until_ready((lo, hi))
    ref_lo, _ = _rnn_reference(h_L, weight_input, weight_recurrent, bias,
                               jnp.float32)
    ref_hi, _ = _rnn_reference(h_U, weight_input, weight_recurrent, bias,
                               jnp.float32)
    assert bool(jnp.allclose(lo, ref_lo, atol=1e-4, rtol=1e-4))
    assert bool(jnp.allclose(hi, ref_hi, atol=1e-4, rtol=1e-4))

    print("KERNEL_OK")
</pallas_src>

<mosaic_0001>
module attributes {stable_mosaic.version = 11 : i64} {
  func.func @kernel(%arg0: i32, %arg1: i32, %arg2: memref<8x2x128xf32, #tpu.memory_space<vmem>>, %arg3: memref<128x128xf32, #tpu.memory_space<vmem>>, %arg4: memref<8x2x128xf32, #tpu.memory_space<vmem>>, %arg5: memref<2x128xf32, #tpu.memory_space<vmem>>) attributes {dimension_semantics = [#tpu.dimension_semantics<parallel>, #tpu.dimension_semantics<arbitrary>], iteration_bounds = array<i64: 1, 1>, scalar_prefetch = 0 : i64, scratch_operands = 1 : i64, tpu.core_type = #tpu.core_type<tc>, window_params = [{transform_indices = @transform_0, window_bounds = array<i64: 8, 2, 128>}, {pipeline_mode = #tpu.pipeline_mode<synchronous>, transform_indices = @transform_1, window_bounds = array<i64: 128, 128>}, {transform_indices = @transform_2, window_bounds = array<i64: 8, 2, 128>}]} {
    %c0_i32 = arith.constant 0 : i32
    %0 = arith.cmpi eq, %arg1, %c0_i32 : i32
    %1 = arith.extui %0 : i1 to i32
    %c0_i32_0 = arith.constant 0 : i32
    %2 = arith.cmpi ne, %1, %c0_i32_0 : i32
    scf.if %2 {
      %cst_82 = arith.constant 0.000000e+00 : f32
      %84 = vector.broadcast %cst_82 : f32 to vector<2x128xf32>
      %c0_83 = arith.constant 0 : index
      %c0_84 = arith.constant 0 : index
      %85 = vector.load %arg5[%c0_83, %c0_84] : memref<2x128xf32, #tpu.memory_space<vmem>>, vector<2x128xf32>
      tpu.vector_store %arg5[%c0_83, %c0_84], %84 {strides = array<i32>} : memref<2x128xf32, #tpu.memory_space<vmem>>, vector<2x128xf32>,
    } else {
    }
    %c0 = arith.constant 0 : index
    %c0_1 = arith.constant 0 : index
    %3 = vector.load %arg3[%c0, %c0_1] : memref<128x128xf32, #tpu.memory_space<vmem>>, vector<128x128xf32>
    %c0_2 = arith.constant 0 : index
    %c0_3 = arith.constant 0 : index
    %4 = vector.load %arg5[%c0_2, %c0_3] : memref<2x128xf32, #tpu.memory_space<vmem>>, vector<2x128xf32>
    %cst = arith.constant dense<0.000000e+00> : vector<2x128xf32>
    %5 = tpu.matmul %4, %3, %cst {dimension_numbers = #tpu.dot_dimension_numbers<[1], [0], [0], [1], [0, 0, 1, 1], [], []>} : vector<2x128xf32>, vector<128x128xf32>, vector<2x128xf32> -> vector<2x128xf32>
    %c0_4 = arith.constant 0 : index
    %c0_5 = arith.constant 0 : index
    %c0_6 = arith.constant 0 : index
    %6 = vector.load %arg2[%c0_4, %c0_5, %c0_6] : memref<8x2x128xf32, #tpu.memory_space<vmem>>, vector<1x2x128xf32>
    %7 = vector.shape_cast %6 : vector<1x2x128xf32> to vector<2x128xf32>
    %8 = arith.addf %5, %7 : vector<2x128xf32>
    %9 = math.tanh %8 : vector<2x128xf32>
    %c0_7 = arith.constant 0 : index
    %c0_8 = arith.constant 0 : index
    %10 = vector.load %arg5[%c0_7, %c0_8] : memref<2x128xf32, #tpu.memory_space<vmem>>, vector<2x128xf32>
    tpu.vector_store %arg5[%c0_7, %c0_8], %9 {strides = array<i32>} : memref<2x128xf32, #tpu.memory_space<vmem>>, vector<2x128xf32>,
    %c0_9 = arith.constant 0 : index
    %c0_10 = arith.constant 0 : index
    %c0_11 = arith.constant 0 : index
    %11 = vector.load %arg4[%c0_9, %c0_10, %c0_11] : memref<8x2x128xf32, #tpu.memory_space<vmem>>, vector<1x2x128xf32>
    %12 = vector.shape_cast %11 : vector<1x2x128xf32> to vector<2x128xf32>
    %13 = vector.shape_cast %9 : vector<2x128xf32> to vector<1x2x128xf32>
    tpu.vector_store %arg4[%c0_9, %c0_10, %c0_11], %13 {strides = array<i32>} : memref<8x2x128xf32, #tpu.memory_space<vmem>>, vector<1x2x128xf32>,
    %c0_12 = arith.constant 0 : index
    %c0_13 = arith.constant 0 : index
    %14 = vector.load %arg5[%c0_12, %c0_13] : memref<2x128xf32, #tpu.memory_space<vmem>>, vector<2x128xf32>
    %cst_14 = arith.constant dense<0.000000e+00> : vector<2x128xf32>
    %15 = tpu.matmul %14, %3, %cst_14 {dimension_numbers = #tpu.dot_dimension_numbers<[1], [0], [0], [1], [0, 0, 1, 1], [], []>} : vector<2x128xf32>, vector<128x128xf32>, vector<2x128xf32> -> vector<2x128xf32>
    %c1 = arith.constant 1 : index
    %c0_15 = arith.constant 0 : index
    %c0_16 = arith.constant 0 : index
    %16 = vector.load %arg2[%c1, %c0_15, %c0_16] : memref<8x2x128xf32, #tpu.memory_space<vmem>>, vector<1x2x128xf32>
    %17 = vector.shape_cast %16 : vector<1x2x128xf32> to vector<2x128xf32>
    %18 = arith.addf %15, %17 : vector<2x128xf32>
    %19 = math.tanh %18 : vector<2x128xf32>
    %c0_17 = arith.constant 0 : index
    %c0_18 = arith.constant 0 : index
    %20 = vector.load %arg5[%c0_17, %c0_18] : memref<2x128xf32, #tpu.memory_space<vmem>>, vector<2x128xf32>
    tpu.vector_store %arg5[%c0_17, %c0_18], %19 {strides = array<i32>} : memref<2x128xf32, #tpu.memory_space<vmem>>, vector<2x128xf32>,
    %c1_19 = arith.constant 1 : index
    %c0_20 = arith.constant 0 : index
    %c0_21 = arith.constant 0 : index
    %21 = vector.load %arg4[%c1_19, %c0_20, %c0_21] : memref<8x2x128xf32, #tpu.memory_space<vmem>>, vector<1x2x128xf32>
    %22 = vector.shape_cast %21 : vector<1x2x128xf32> to vector<2x128xf32>
    %23 = vector.shape_cast %19 : vector<2x128xf32> to vector<1x2x128xf32>
    tpu.vector_store %arg4[%c1_19, %c0_20, %c0_21], %23 {strides = array<i32>} : memref<8x2x128xf32, #tpu.memory_space<vmem>>, vector<1x2x128xf32>,
    %c0_22 = arith.constant 0 : index
    %c0_23 = arith.constant 0 : index
    %24 = vector.load %arg5[%c0_22, %c0_23] : memref<2x128xf32, #tpu.memory_space<vmem>>, vector<2x128xf32>
    %cst_24 = arith.constant dense<0.000000e+00> : vector<2x128xf32>
    %25 = tpu.matmul %24, %3, %cst_24 {dimension_numbers = #tpu.dot_dimension_numbers<[1], [0], [0], [1], [0, 0, 1, 1], [], []>} : vector<2x128xf32>, vector<128x128xf32>, vector<2x128xf32> -> vector<2x128xf32>
    %c2 = arith.constant 2 : index
    %c0_25 = arith.constant 0 : index
    %c0_26 = arith.constant 0 : index
    %26 = vector.load %arg2[%c2, %c0_25, %c0_26] : memref<8x2x128xf32, #tpu.memory_space<vmem>>, vector<1x2x128xf32>
    %27 = vector.shape_cast %26 : vector<1x2x128xf32> to vector<2x128xf32>
    %28 = arith.addf %25, %27 : vector<2x128xf32>
    %29 = math.tanh %28 : vector<2x128xf32>
    %c0_27 = arith.constant 0 : index
    %c0_28 = arith.constant 0 : index
    %30 = vector.load %arg5[%c0_27, %c0_28] : memref<2x128xf32, #tpu.memory_space<vmem>>, vector<2x128xf32>
    tpu.vector_store %arg5[%c0_27, %c0_28], %29 {strides = array<i32>} : memref<2x128xf32, #tpu.memory_space<vmem>>, vector<2x128xf32>,
    %c2_29 = arith.constant 2 : index
    %c0_30 = arith.constant 0 : index
    %c0_31 = arith.constant 0 : index
    %31 = vector.load %arg4[%c2_29, %c0_30, %c0_31] : memref<8x2x128xf32, #tpu.memory_space<vmem>>, vector<1x2x128xf32>
    %32 = vector.shape_cast %31 : vector<1x2x128xf32> to vector<2x128xf32>
    %33 = vector.shape_cast %29 : vector<2x128xf32> to vector<1x2x128xf32>
    tpu.vector_store %arg4[%c2_29, %c0_30, %c0_31], %33 {strides = array<i32>} : memref<8x2x128xf32, #tpu.memory_space<vmem>>, vector<1x2x128xf32>,
    %c0_32 = arith.constant 0 : index
    %c0_33 = arith.constant 0 : index
    %34 = vector.load %arg5[%c0_32, %c0_33] : memref<2x128xf32, #tpu.memory_space<vmem>>, vector<2x128xf32>
    %cst_34 = arith.constant dense<0.000000e+00> : vector<2x128xf32>
    %35 = tpu.matmul %34, %3, %cst_34 {dimension_numbers = #tpu.dot_dimension_numbers<[1], [0], [0], [1], [0, 0, 1, 1], [], []>} : vector<2x128xf32>, vector<128x128xf32>, vector<2x128xf32> -> vector<2x128xf32>
    %c3 = arith.constant 3 : index
    %c0_35 = arith.constant 0 : index
    %c0_36 = arith.constant 0 : index
    %36 = vector.load %arg2[%c3, %c0_35, %c0_36] : memref<8x2x128xf32, #tpu.memory_space<vmem>>, vector<1x2x128xf32>
    %37 = vector.shape_cast %36 : vector<1x2x128xf32> to vector<2x128xf32>
    %38 = arith.addf %35, %37 : vector<2x128xf32>
    %39 = math.tanh %38 : vector<2x128xf32>
    %c0_37 = arith.constant 0 : index
    %c0_38 = arith.constant 0 : index
    %40 = vector.load %arg5[%c0_37, %c0_38] : memref<2x128xf32, #tpu.memory_space<vmem>>, vector<2x128xf32>
    tpu.vector_store %arg5[%c0_37, %c0_38], %39 {strides = array<i32>} : memref<2x128xf32, #tpu.memory_space<vmem>>, vector<2x128xf32>,
    %c3_39 = arith.constant 3 : index
    %c0_40 = arith.constant 0 : index
    %c0_41 = arith.constant 0 : index
    %41 = vector.load %arg4[%c3_39, %c0_40, %c0_41] : memref<8x2x128xf32, #tpu.memory_space<vmem>>, vector<1x2x128xf32>
    %42 = vector.shape_cast %41 : vector<1x2x128xf32> to vector<2x128xf32>
    %43 = vector.shape_cast %39 : vector<2x128xf32> to vector<1x2x128xf32>
    tpu.vector_store %arg4[%c3_39, %c0_40, %c0_41], %43 {strides = array<i32>} : memref<8x2x128xf32, #tpu.memory_space<vmem>>, vector<1x2x128xf32>,
    %c0_42 = arith.constant 0 : index
    %c0_43 = arith.constant 0 : index
    %44 = vector.load %arg5[%c0_42, %c0_43] : memref<2x128xf32, #tpu.memory_space<vmem>>, vector<2x128xf32>
    %cst_44 = arith.constant dense<0.000000e+00> : vector<2x128xf32>
    %45 = tpu.matmul %44, %3, %cst_44 {dimension_numbers = #tpu.dot_dimension_numbers<[1], [0], [0], [1], [0, 0, 1, 1], [], []>} : vector<2x128xf32>, vector<128x128xf32>, vector<2x128xf32> -> vector<2x128xf32>
    %c4 = arith.constant 4 : index
    %c0_45 = arith.constant 0 : index
    %c0_46 = arith.constant 0 : index
    %46 = vector.load %arg2[%c4, %c0_45, %c0_46] : memref<8x2x128xf32, #tpu.memory_space<vmem>>, vector<1x2x128xf32>
    %47 = vector.shape_cast %46 : vector<1x2x128xf32> to vector<2x128xf32>
    %48 = arith.addf %45, %47 : vector<2x128xf32>
    %49 = math.tanh %48 : vector<2x128xf32>
    %c0_47 = arith.constant 0 : index
    %c0_48 = arith.constant 0 : index
    %50 = vector.load %arg5[%c0_47, %c0_48] : memref<2x128xf32, #tpu.memory_space<vmem>>, vector<2x128xf32>
    tpu.vector_store %arg5[%c0_47, %c0_48], %49 {strides = array<i32>} : memref<2x128xf32, #tpu.memory_space<vmem>>, vector<2x128xf32>,
    %c4_49 = arith.constant 4 : index
    %c0_50 = arith.constant 0 : index
    %c0_51 = arith.constant 0 : index
    %51 = vector.load %arg4[%c4_49, %c0_50, %c0_51] : memref<8x2x128xf32, #tpu.memory_space<vmem>>, vector<1x2x128xf32>
    %52 = vector.shape_cast %51 : vector<1x2x128xf32> to vector<2x128xf32>
    %53 = vector.shape_cast %49 : vector<2x128xf32> to vector<1x2x128xf32>
    tpu.vector_store %arg4[%c4_49, %c0_50, %c0_51], %53 {strides = array<i32>} : memref<8x2x128xf32, #tpu.memory_space<vmem>>, vector<1x2x128xf32>,
    %c0_52 = arith.constant 0 : index
    %c0_53 = arith.constant 0 : index
    %54 = vector.load %arg5[%c0_52, %c0_53] : memref<2x128xf32, #tpu.memory_space<vmem>>, vector<2x128xf32>
    %cst_54 = arith.constant dense<0.000000e+00> : vector<2x128xf32>
    %55 = tpu.matmul %54, %3, %cst_54 {dimension_numbers = #tpu.dot_dimension_numbers<[1], [0], [0], [1], [0, 0, 1, 1], [], []>} : vector<2x128xf32>, vector<128x128xf32>, vector<2x128xf32> -> vector<2x128xf32>
    %c5 = arith.constant 5 : index
    %c0_55 = arith.constant 0 : index
    %c0_56 = arith.constant 0 : index
    %56 = vector.load %arg2[%c5, %c0_55, %c0_56] : memref<8x2x128xf32, #tpu.memory_space<vmem>>, vector<1x2x128xf32>
    %57 = vector.shape_cast %56 : vector<1x2x128xf32> to vector<2x128xf32>
    %58 = arith.addf %55, %57 : vector<2x128xf32>
    %59 = math.tanh %58 : vector<2x128xf32>
    %c0_57 = arith.constant 0 : index
    %c0_58 = arith.constant 0 : index
    %60 = vector.load %arg5[%c0_57, %c0_58] : memref<2x128xf32, #tpu.memory_space<vmem>>, vector<2x128xf32>
    tpu.vector_store %arg5[%c0_57, %c0_58], %59 {strides = array<i32>} : memref<2x128xf32, #tpu.memory_space<vmem>>, vector<2x128xf32>,
    %c5_59 = arith.constant 5 : index
    %c0_60 = arith.constant 0 : index
    %c0_61 = arith.constant 0 : index
    %61 = vector.load %arg4[%c5_59, %c0_60, %c0_61] : memref<8x2x128xf32, #tpu.memory_space<vmem>>, vector<1x2x128xf32>
    %62 = vector.shape_cast %61 : vector<1x2x128xf32> to vector<2x128xf32>
    %63 = vector.shape_cast %59 : vector<2x128xf32> to vector<1x2x128xf32>
    tpu.vector_store %arg4[%c5_59, %c0_60, %c0_61], %63 {strides = array<i32>} : memref<8x2x128xf32, #tpu.memory_space<vmem>>, vector<1x2x128xf32>,
    %c0_62 = arith.constant 0 : index
    %c0_63 = arith.constant 0 : index
    %64 = vector.load %arg5[%c0_62, %c0_63] : memref<2x128xf32, #tpu.memory_space<vmem>>, vector<2x128xf32>
    %cst_64 = arith.constant dense<0.000000e+00> : vector<2x128xf32>
    %65 = tpu.matmul %64, %3, %cst_64 {dimension_numbers = #tpu.dot_dimension_numbers<[1], [0], [0], [1], [0, 0, 1, 1], [], []>} : vector<2x128xf32>, vector<128x128xf32>, vector<2x128xf32> -> vector<2x128xf32>
    %c6 = arith.constant 6 : index
    %c0_65 = arith.constant 0 : index
    %c0_66 = arith.constant 0 : index
    %66 = vector.load %arg2[%c6, %c0_65, %c0_66] : memref<8x2x128xf32, #tpu.memory_space<vmem>>, vector<1x2x128xf32>
    %67 = vector.shape_cast %66 : vector<1x2x128xf32> to vector<2x128xf32>
    %68 = arith.addf %65, %67 : vector<2x128xf32>
    %69 = math.tanh %68 : vector<2x128xf32>
    %c0_67 = arith.constant 0 : index
    %c0_68 = arith.constant 0 : index
    %70 = vector.load %arg5[%c0_67, %c0_68] : memref<2x128xf32, #tpu.memory_space<vmem>>, vector<2x128xf32>
    tpu.vector_store %arg5[%c0_67, %c0_68], %69 {strides = array<i32>} : memref<2x128xf32, #tpu.memory_space<vmem>>, vector<2x128xf32>,
    %c6_69 = arith.constant 6 : index
    %c0_70 = arith.constant 0 : index
    %c0_71 = arith.constant 0 : index
    %71 = vector.load %arg4[%c6_69, %c0_70, %c0_71] : memref<8x2x128xf32, #tpu.memory_space<vmem>>, vector<1x2x128xf32>
    %72 = vector.shape_cast %71 : vector<1x2x128xf32> to vector<2x128xf32>
    %73 = vector.shape_cast %69 : vector<2x128xf32> to vector<1x2x128xf32>
    tpu.vector_store %arg4[%c6_69, %c0_70, %c0_71], %73 {strides = array<i32>} : memref<8x2x128xf32, #tpu.memory_space<vmem>>, vector<1x2x128xf32>,
    %c0_72 = arith.constant 0 : index
    %c0_73 = arith.constant 0 : index
    %74 = vector.load %arg5[%c0_72, %c0_73] : memref<2x128xf32, #tpu.memory_space<vmem>>, vector<2x128xf32>
    %cst_74 = arith.constant dense<0.000000e+00> : vector<2x128xf32>
    %75 = tpu.matmul %74, %3, %cst_74 {dimension_numbers = #tpu.dot_dimension_numbers<[1], [0], [0], [1], [0, 0, 1, 1], [], []>} : vector<2x128xf32>, vector<128x128xf32>, vector<2x128xf32> -> vector<2x128xf32>
    %c7 = arith.constant 7 : index
    %c0_75 = arith.constant 0 : index
    %c0_76 = arith.constant 0 : index
    %76 = vector.load %arg2[%c7, %c0_75, %c0_76] : memref<8x2x128xf32, #tpu.memory_space<vmem>>, vector<1x2x128xf32>
    %77 = vector.shape_cast %76 : vector<1x2x128xf32> to vector<2x128xf32>
    %78 = arith.addf %75, %77 : vector<2x128xf32>
    %79 = math.tanh %78 : vector<2x128xf32>
    %c0_77 = arith.constant 0 : index
    %c0_78 = arith.constant 0 : index
    %80 = vector.load %arg5[%c0_77, %c0_78] : memref<2x128xf32, #tpu.memory_space<vmem>>, vector<2x128xf32>
    tpu.vector_store %arg5[%c0_77, %c0_78], %79 {strides = array<i32>} : memref<2x128xf32, #tpu.memory_space<vmem>>, vector<2x128xf32>,
    %c7_79 = arith.constant 7 : index
    %c0_80 = arith.constant 0 : index
    %c0_81 = arith.constant 0 : index
    %81 = vector.load %arg4[%c7_79, %c0_80, %c0_81] : memref<8x2x128xf32, #tpu.memory_space<vmem>>, vector<1x2x128xf32>
    %82 = vector.shape_cast %81 : vector<1x2x128xf32> to vector<2x128xf32>
    %83 = vector.shape_cast %79 : vector<2x128xf32> to vector<1x2x128xf32>
    tpu.vector_store %arg4[%c7_79, %c0_80, %c0_81], %83 {strides = array<i32>} : memref<8x2x128xf32, #tpu.memory_space<vmem>>, vector<1x2x128xf32>,
    return
  }
  func.func @transform_0(%arg0: i32, %arg1: i32) -> (i32, i32, i32) {
    %c0_i32 = arith.constant 0 : i32
    %c0_i32_0 = arith.constant 0 : i32
    return %arg1, %arg0, %c0_i32 : i32, i32, i32
  }
  func.func @transform_1(%arg0: i32, %arg1: i32) -> (i32, i32) {
    %c0_i32 = arith.constant 0 : i32
    %c0_i32_0 = arith.constant 0 : i32
    %c0_i32_1 = arith.constant 0 : i32
    return %c0_i32, %c0_i32_0 : i32, i32
  }
  func.func @transform_2(%arg0: i32, %arg1: i32) -> (i32, i32, i32) {
    %c0_i32 = arith.constant 0 : i32
    %c0_i32_0 = arith.constant 0 : i32
    return %arg1, %arg0, %c0_i32 : i32, i32, i32
  }
}

</mosaic_0001>

<llo_original>
// kernel: tpu_custom_call.1
$region0: #{tpu_custom_call.1}
  #allocation0 [shape = 'u32[]', space=smem, size = 0x4, offset = 0x4, fixed_abs, tag = 'smem constant byte address 0x4 - core index']
  #allocation1 [shape = 'u32[144,128]{1,0:T(1,128)}', space=vmem, size = 0x12000, scoped, tag = 'internal scratch']
  #allocation2 [shape = 'f32[2,128]{1,0:T(2,128)}', space=vmem, size = 0x400, scoped, tag = 'scratch operand']
  %s0 = inlined_call_operand.hbm [shape: f32[8,2,128], index: 0, kind: input, shape index: {}]
  %s1 = inlined_call_operand.hbm [shape: f32[128,128], index: 1, kind: input, shape index: {}]
  %s2 = inlined_call_operand.hbm [shape: f32[8,2,128], index: 2, kind: output, shape index: {}]
  %s3 = sld [smem:[#allocation0]]
  $region30: #{tpu_custom_call.1} parent=0
    _
  %s5 = ssub.s32 1, %s3
  %s6 = scalar_select 0, %s5, %s3
  $region1: #{tpu_custom_call.1} parent=0
    #allocation3 [shape = 'u8[8192]{0}', space=vmem, size = 0x2000, scoped, tag = 'input window, operand 0, single buffered']
    #allocation4 [shape = 's32[1]{0}', space=sflag, size = 0x4, scoped, tag = 'scoped memory for tpu_custom_call.1']
    #allocation5 [shape = 's32[1]{0}', space=sflag, size = 0x4, scoped, tag = 'scoped memory for tpu_custom_call.1']
    #allocation6 [shape = 'u8[65536]{0}', space=vmem, size = 0x10000, scoped, tag = 'input window, operand 1, single buffered']
    #allocation7 [shape = 's32[1]{0}', space=sflag, size = 0x4, scoped, tag = 'scoped memory for tpu_custom_call.1']
    #allocation8 [shape = 'u8[8192]{0}', space=vmem, size = 0x2000, scoped, tag = 'output window, operand 0, single buffered']
    %7 = vsyncpa [#allocation4], 0
    %8 = vsyncpa [#allocation7], 0
    %9 = vsyncpa [#allocation5], 0
    // Predicated region
    $region2: #{tpu_custom_call.1} parent=1 // pred_check
      _
    $region3: #{tpu_custom_call.1} parent=1 // pred_check_branch
      %11 = sbr.rel (0) target = $region5
    $region4: #{tpu_custom_call.1} parent=1 // pred_region
      %s13 = ssub.s32 256, 256
      %14 = vsyncadd [#allocation4], %s13
      %s15 = sshll.u32 [#allocation3], 4
      %s16 = int_to_ptr.vmem [resolvable:$true] %s15
      %21 = dma.hbm_to_vmem [thread:$0]  %s0, 256, %s16, [#allocation4], 32, 32, 2
    $region5: #{tpu_custom_call.1} parent=1 // pred_fallthru
      _
    // Predicated region
    $region6: #{tpu_custom_call.1} parent=1 // pred_check
      _
    $region7: #{tpu_custom_call.1} parent=1 // pred_check_branch
      %23 = sbr.rel (0) target = $region9
    $region8: #{tpu_custom_call.1} parent=1 // pred_region
      %s25 = ssub.s32 2048, 2048
      %26 = vsyncadd [#allocation7], %s25
      %s27 = sshll.u32 [#allocation6], 4
      %s28 = int_to_ptr.vmem [resolvable:$true] %s27
      %33 = dma.hbm_to_vmem [thread:$0]  %s1, 2048, %s28, [#allocation7], 128, 128, 8
    $region9: #{tpu_custom_call.1} parent=1 // pred_fallthru
      _
    // Predicated region
    $region10: #{tpu_custom_call.1} parent=1 // pred_check
      _
    $region11: #{tpu_custom_call.1} parent=1 // pred_check_branch
      %35 = sbr.rel (0) target = $region13
    $region12: #{tpu_custom_call.1} parent=1 // pred_region
      %36 = dma.done [#allocation4], 256
    $region13: #{tpu_custom_call.1} parent=1 // pred_fallthru
      _
    // Predicated region
    $region14: #{tpu_custom_call.1} parent=1 // pred_check
      _
    $region15: #{tpu_custom_call.1} parent=1 // pred_check_branch
      %38 = sbr.rel (0) target = $region17
    $region16: #{tpu_custom_call.1} parent=1 // pred_region
      %39 = dma.done [#allocation7], 2048
    $region17: #{tpu_custom_call.1} parent=1 // pred_fallthru
      _
    %p40 = scmp.eq.s32.totalorder 0, 0
    // Predicated region
    $region18: #{tpu_custom_call.1} parent=1 // pred_check
      %p41 = pneg %p40
    $region19: #{tpu_custom_call.1} parent=1 // pred_check_branch
      %43 = sbr.rel (%p41) target = $region21
    $region20: #{tpu_custom_call.1} parent=1 // pred_region
      %44 = vst [vmem:[#allocation2] sm:$0x3] 0.0
    $region21: #{tpu_custom_call.1} parent=1 // pred_fallthru
      _
    %v45 = vld [vmem:[#allocation6] sm:$0xff]
    %v46 = vld [vmem:[#allocation6 + $0x8] sm:$0xff]
    %v47 = vld [vmem:[#allocation6 + $0x10] sm:$0xff]
    %v48 = vld [vmem:[#allocation6 + $0x18] sm:$0xff]
    %v49 = vld [vmem:[#allocation6 + $0x20] sm:$0xff]
    %v50 = vld [vmem:[#allocation6 + $0x28] sm:$0xff]
    %v51 = vld [vmem:[#allocation6 + $0x30] sm:$0xff]
    %v52 = vld [vmem:[#allocation6 + $0x38] sm:$0xff]
    %v53 = vld [vmem:[#allocation6 + $0x40] sm:$0xff]
    %v54 = vld [vmem:[#allocation6 + $0x48] sm:$0xff]
    %v55 = vld [vmem:[#allocation6 + $0x50] sm:$0xff]
    %v56 = vld [vmem:[#allocation6 + $0x58] sm:$0xff]
    %v57 = vld [vmem:[#allocation6 + $0x60] sm:$0xff]
    %v58 = vld [vmem:[#allocation6 + $0x68] sm:$0xff]
    %v59 = vld [vmem:[#allocation6 + $0x70] sm:$0xff]
    %v60 = vld [vmem:[#allocation6 + $0x78] sm:$0xff]
    %v61 = vld [vmem:[#allocation2] sm:$0x3]
    %v62 = vld [vmem:[#allocation3] sm:$0x3]
    %63 = vmatprep.subr.mxu0 0.0
    %64 = vmatpush1.msra.mxu0 %v45
    %65 = vmatprep.subr.mxu0 0.0
    %66 = vmatpush1.msra.mxu0 %v46
    %67 = vmatprep.subr.mxu0 0.0
    %68 = vmatpush1.msra.mxu0 %v47
    %69 = vmatprep.subr.mxu0 0.0
    %70 = vmatpush1.msra.mxu0 %v48
    %71 = vmatprep.subr.mxu0 0.0
    %72 = vmatpush1.msra.mxu0 %v49
    %73 = vmatprep.subr.mxu0 0.0
    %74 = vmatpush1.msra.mxu0 %v50
    %75 = vmatprep.subr.mxu0 0.0
    %76 = vmatpush1.msra.mxu0 %v51
    %77 = vmatprep.subr.mxu0 0.0
    %78 = vmatpush1.msra.mxu0 %v52
    %79 = vmatprep.subr.mxu0 0.0
    %80 = vmatpush1.msra.mxu0 %v53
    %81 = vmatprep.subr.mxu0 0.0
    %82 = vmatpush1.msra.mxu0 %v54
    %83 = vmatprep.subr.mxu0 0.0
    %84 = vmatpush1.msra.mxu0 %v55
    %85 = vmatprep.subr.mxu0 0.0
    %86 = vmatpush1.msra.mxu0 %v56
    %87 = vmatprep.subr.mxu0 0.0
    %88 = vmatpush1.msra.mxu0 %v57
    %89 = vmatprep.subr.mxu0 0.0
    %90 = vmatpush1.msra.mxu0 %v58
    %91 = vmatprep.subr.mxu0 0.0
    %92 = vmatpush1.msra.mxu0 %v59
    %93 = vmatprep.subr.mxu0 0.0
    %94 = vmatpush1.msra.mxu0 %v60
    %95 = vmatprep.subr.mxu0 0.0
    %96 = vmatpush1.msra.mxu0 0.0
    %97 = vmatprep.subr.mxu0 0.0
    %98 = vmatpush1.msra.mxu0 0.0
    %99 = vmatprep.subr.mxu0 0.0
    %100 = vmatpush1.msra.mxu0 0.0
    %101 = vmatprep.subr.mxu0 0.0
    %102 = vmatpush1.msra.mxu0 0.0
    %103 = vmatprep.subr.mxu0 0.0
    %104 = vmatpush1.msra.mxu0 0.0
    %105 = vmatprep.subr.mxu0 0.0
    %106 = vmatpush1.msra.mxu0 0.0
    %107 = vmatprep.subr.mxu0 0.0
    %108 = vmatpush1.msra.mxu0 0.0
    %109 = vmatprep.subr.mxu0 0.0
    %110 = vmatpush1.msra.mxu0 0.0
    %111 = vmatprep.subr.mxu0 0.0
    %112 = vmatpush1.msra.mxu0 0.0
    %113 = vmatprep.subr.mxu0 0.0
    %114 = vmatpush1.msra.mxu0 0.0
    %115 = vmatprep.subr.mxu0 0.0
    %116 = vmatpush1.msra.mxu0 0.0
    %117 = vmatprep.subr.mxu0 0.0
    %118 = vmatpush1.msra.mxu0 0.0
    %119 = vmatprep.subr.mxu0 0.0
    %120 = vmatpush1.msra.mxu0 0.0
    %121 = vmatprep.subr.mxu0 0.0
    %122 = vmatpush1.msra.mxu0 0.0
    %123 = vmatprep.subr.mxu0 0.0
    %124 = vmatpush1.msra.mxu0 0.0
    %125 = vmatprep.subr.mxu0 0.0
    %126 = vmatpush1.msra.mxu0 0.0
    %127 = vmatprep.mubr.f32.mxu0 0.0
    %128 = vmatmul.mubr.f32.gmra.mrb[0].mxu0 %v61
    %v129 = vpop.f32.mrb[0].mxu0
    %v130 = vadd.f32 %v62, %v129
    %v131 = vpop.f32.mrb[0].mxu0
    %132 = vdwg.mxu0
    %v133 = vtanh.pop %v130
    %134 = vst [vmem:[#allocation2] sm:$0x3] %v133
    %135 = vst [vmem:[#allocation8] sm:$0x3] %v133
    %v136 = vld [vmem:[#allocation2] sm:$0x3]
    %s137 = scalar_lea.vmem [#allocation3], 2
    %v138 = vld [vmem:[%s137] sm:$0x3]
    %139 = vmatprep.subr.mxu0 0.0
    %140 = vmatpush1.msra.mxu0 %v45
    %141 = vmatprep.subr.mxu0 0.0
    %142 = vmatpush1.msra.mxu0 %v46
    %143 = vmatprep.subr.mxu0 0.0
    %144 = vmatpush1.msra.mxu0 %v47
    %145 = vmatprep.subr.mxu0 0.0
    %146 = vmatpush1.msra.mxu0 %v48
    %147 = vmatprep.subr.mxu0 0.0
    %148 = vmatpush1.msra.mxu0 %v49
    %149 = vmatprep.subr.mxu0 0.0
    %150 = vmatpush1.msra.mxu0 %v50
    %151 = vmatprep.subr.mxu0 0.0
    %152 = vmatpush1.msra.mxu0 %v51
    %153 = vmatprep.subr.mxu0 0.0
    %154 = vmatpush1.msra.mxu0 %v52
    %155 = vmatprep.subr.mxu0 0.0
    %156 = vmatpush1.msra.mxu0 %v53
    %157 = vmatprep.subr.mxu0 0.0
    %158 = vmatpush1.msra.mxu0 %v54
    %159 = vmatprep.subr.mxu0 0.0
    %160 = vmatpush1.msra.mxu0 %v55
    %161 = vmatprep.subr.mxu0 0.0
    %162 = vmatpush1.msra.mxu0 %v56
    %163 = vmatprep.subr.mxu0 0.0
    %164 = vmatpush1.msra.mxu0 %v57
    %165 = vmatprep.subr.mxu0 0.0
    %166 = vmatpush1.msra.mxu0 %v58
    %167 = vmatprep.subr.mxu0 0.0
    %168 = vmatpush1.msra.mxu0 %v59
    %169 = vmatprep.subr.mxu0 0.0
    %170 = vmatpush1.msra.mxu0 %v60
    %171 = vmatprep.subr.mxu0 0.0
    %172 = vmatpush1.msra.mxu0 0.0
    %173 = vmatprep.subr.mxu0 0.0
    %174 = vmatpush1.msra.mxu0 0.0
    %175 = vmatprep.subr.mxu0 0.0
    %176 = vmatpush1.msra.mxu0 0.0
    %177 = vmatprep.subr.mxu0 0.0
    %178 = vmatpush1.msra.mxu0 0.0
    %179 = vmatprep.subr.mxu0 0.0
    %180 = vmatpush1.msra.mxu0 0.0
    %181 = vmatprep.subr.mxu0 0.0
    %182 = vmatpush1.msra.mxu0 0.0
    %183 = vmatprep.subr.mxu0 0.0
    %184 = vmatpush1.msra.mxu0 0.0
    %185 = vmatprep.subr.mxu0 0.0
    %186 = vmatpush1.msra.mxu0 0.0
    %187 = vmatprep.subr.mxu0 0.0
    %188 = vmatpush1.msra.mxu0 0.0
    %189 = vmatprep.subr.mxu0 0.0
    %190 = vmatpush1.msra.mxu0 0.0
    %191 = vmatprep.subr.mxu0 0.0
    %192 = vmatpush1.msra.mxu0 0.0
    %193 = vmatprep.subr.mxu0 0.0
    %194 = vmatpush1.msra.mxu0 0.0
    %195 = vmatprep.subr.mxu0 0.0
    %196 = vmatpush1.msra.mxu0 0.0
    %197 = vmatprep.subr.mxu0 0.0
    %198 = vmatpush1.msra.mxu0 0.0
    %199 = vmatprep.subr.mxu0 0.0
    %200 = vmatpush1.msra.mxu0 0.0
    %201 = vmatprep.subr.mxu0 0.0
    %202 = vmatpush1.msra.mxu0 0.0
    %203 = vmatprep.mubr.f32.mxu0 0.0
    %204 = vmatmul.mubr.f32.gmra.mrb[0].mxu0 %v136
    %v205 = vpop.f32.mrb[0].mxu0
    %v206 = vadd.f32 %v138, %v205
    %v207 = vpop.f32.mrb[0].mxu0
    %208 = vdwg.mxu0
    %v209 = vtanh.pop %v206
    %210 = vst [vmem:[#allocation2] sm:$0x3] %v209
    %s211 = scalar_lea.vmem [#allocation8], 2
    %212 = vst [vmem:[%s211] sm:$0x3] %v209
    %v213 = vld [vmem:[#allocation2] sm:$0x3]
    %s214 = scalar_lea.vmem [#allocation3], 4
    %v215 = vld [vmem:[%s214] sm:$0x3]
    %216 = vmatprep.subr.mxu0 0.0
    %217 = vmatpush1.msra.mxu0 %v45
    %218 = vmatprep.subr.mxu0 0.0
    %219 = vmatpush1.msra.mxu0 %v46
    %220 = vmatprep.subr.mxu0 0.0
    %221 = vmatpush1.msra.mxu0 %v47
    %222 = vmatprep.subr.mxu0 0.0
    %223 = vmatpush1.msra.mxu0 %v48
    %224 = vmatprep.subr.mxu0 0.0
    %225 = vmatpush1.msra.mxu0 %v49
    %226 = vmatprep.subr.mxu0 0.0
    %227 = vmatpush1.msra.mxu0 %v50
    %228 = vmatprep.subr.mxu0 0.0
    %229 = vmatpush1.msra.mxu0 %v51
    %230 = vmatprep.subr.mxu0 0.0
    %231 = vmatpush1.msra.mxu0 %v52
    %232 = vmatprep.subr.mxu0 0.0
    %233 = vmatpush1.msra.mxu0 %v53
    %234 = vmatprep.subr.mxu0 0.0
    %235 = vmatpush1.msra.mxu0 %v54
    %236 = vmatprep.subr.mxu0 0.0
    %237 = vmatpush1.msra.mxu0 %v55
    %238 = vmatprep.subr.mxu0 0.0
    %239 = vmatpush1.msra.mxu0 %v56
    %240 = vmatprep.subr.mxu0 0.0
    %241 = vmatpush1.msra.mxu0 %v57
    %242 = vmatprep.subr.mxu0 0.0
    %243 = vmatpush1.msra.mxu0 %v58
    %244 = vmatprep.subr.mxu0 0.0
    %245 = vmatpush1.msra.mxu0 %v59
    %246 = vmatprep.subr.mxu0 0.0
    %247 = vmatpush1.msra.mxu0 %v60
    %248 = vmatprep.subr.mxu0 0.0
    %249 = vmatpush1.msra.mxu0 0.0
    %250 = vmatprep.subr.mxu0 0.0
    %251 = vmatpush1.msra.mxu0 0.0
    %252 = vmatprep.subr.mxu0 0.0
    %253 = vmatpush1.msra.mxu0 0.0
    %254 = vmatprep.subr.mxu0 0.0
    %255 = vmatpush1.msra.mxu0 0.0
    %256 = vmatprep.subr.mxu0 0.0
    %257 = vmatpush1.msra.mxu0 0.0
    %258 = vmatprep.subr.mxu0 0.0
    %259 = vmatpush1.msra.mxu0 0.0
    %260 = vmatprep.subr.mxu0 0.0
    %261 = vmatpush1.msra.mxu0 0.0
    %262 = vmatprep.subr.mxu0 0.0
    %263 = vmatpush1.msra.mxu0 0.0
    %264 = vmatprep.subr.mxu0 0.0
    %265 = vmatpush1.msra.mxu0 0.0
    %266 = vmatprep.subr.mxu0 0.0
    %267 = vmatpush1.msra.mxu0 0.0
    %268 = vmatprep.subr.mxu0 0.0
    %269 = vmatpush1.msra.mxu0 0.0
    %270 = vmatprep.subr.mxu0 0.0
    %271 = vmatpush1.msra.mxu0 0.0
    %272 = vmatprep.subr.mxu0 0.0
    %273 = vmatpush1.msra.mxu0 0.0
    %274 = vmatprep.subr.mxu0 0.0
    %275 = vmatpush1.msra.mxu0 0.0
    %276 = vmatprep.subr.mxu0 0.0
    %277 = vmatpush1.msra.mxu0 0.0
    %278 = vmatprep.subr.mxu0 0.0
    %279 = vmatpush1.msra.mxu0 0.0
    %280 = vmatprep.mubr.f32.mxu0 0.0
    %281 = vmatmul.mubr.f32.gmra.mrb[0].mxu0 %v213
    %v282 = vpop.f32.mrb[0].mxu0
    %v283 = vadd.f32 %v215, %v282
    %v284 = vpop.f32.mrb[0].mxu0
    %285 = vdwg.mxu0
    %v286 = vtanh.pop %v283
    %287 = vst [vmem:[#allocation2] sm:$0x3] %v286
    %s288 = scalar_lea.vmem [#allocation8], 4
    %289 = vst [vmem:[%s288] sm:$0x3] %v286
    %v290 = vld [vmem:[#allocation2] sm:$0x3]
    %s291 = scalar_lea.vmem [#allocation3], 6
    %v292 = vld [vmem:[%s291] sm:$0x3]
    %293 = vmatprep.subr.mxu0 0.0
    %294 = vmatpush1.msra.mxu0 %v45
    %295 = vmatprep.subr.mxu0 0.0
    %296 = vmatpush1.msra.mxu0 %v46
    %297 = vmatprep.subr.mxu0 0.0
    %298 = vmatpush1.msra.mxu0 %v47
    %299 = vmatprep.subr.mxu0 0.0
    %300 = vmatpush1.msra.mxu0 %v48
    %301 = vmatprep.subr.mxu0 0.0
    %302 = vmatpush1.msra.mxu0 %v49
    %303 = vmatprep.subr.mxu0 0.0
    %304 = vmatpush1.msra.mxu0 %v50
    %305 = vmatprep.subr.mxu0 0.0
    %306 = vmatpush1.msra.mxu0 %v51
    %307 = vmatprep.subr.mxu0 0.0
    %308 = vmatpush1.msra.mxu0 %v52
    %309 = vmatprep.subr.mxu0 0.0
    %310 = vmatpush1.msra.mxu0 %v53
    %311 = vmatprep.subr.mxu0 0.0
    %312 = vmatpush1.msra.mxu0 %v54
    %313 = vmatprep.subr.mxu0 0.0
    %314 = vmatpush1.msra.mxu0 %v55
    %315 = vmatprep.subr.mxu0 0.0
    %316 = vmatpush1.msra.mxu0 %v56
    %317 = vmatprep.subr.mxu0 0.0
    %318 = vmatpush1.msra.mxu0 %v57
    %319 = vmatprep.subr.mxu0 0.0
    %320 = vmatpush1.msra.mxu0 %v58
    %321 = vmatprep.subr.mxu0 0.0
    %322 = vmatpush1.msra.mxu0 %v59
    %323 = vmatprep.subr.mxu0 0.0
    %324 = vmatpush1.msra.mxu0 %v60
    %325 = vmatprep.subr.mxu0 0.0
    %326 = vmatpush1.msra.mxu0 0.0
    %327 = vmatprep.subr.mxu0 0.0
    %328 = vmatpush1.msra.mxu0 0.0
    %329 = vmatprep.subr.mxu0 0.0
    %330 = vmatpush1.msra.mxu0 0.0
    %331 = vmatprep.subr.mxu0 0.0
    %332 = vmatpush1.msra.mxu0 0.0
    %333 = vmatprep.subr.mxu0 0.0
    %334 = vmatpush1.msra.mxu0 0.0
    %335 = vmatprep.subr.mxu0 0.0
    %336 = vmatpush1.msra.mxu0 0.0
    %337 = vmatprep.subr.mxu0 0.0
    %338 = vmatpush1.msra.mxu0 0.0
    %339 = vmatprep.subr.mxu0 0.0
    %340 = vmatpush1.msra.mxu0 0.0
    %341 = vmatprep.subr.mxu0 0.0
    %342 = vmatpush1.msra.mxu0 0.0
    %343 = vmatprep.subr.mxu0 0.0
    %344 = vmatpush1.msra.mxu0 0.0
    %345 = vmatprep.subr.mxu0 0.0
    %346 = vmatpush1.msra.mxu0 0.0
    %347 = vmatprep.subr.mxu0 0.0
    %348 = vmatpush1.msra.mxu0 0.0
    %349 = vmatprep.subr.mxu0 0.0
    %350 = vmatpush1.msra.mxu0 0.0
    %351 = vmatprep.subr.mxu0 0.0
    %352 = vmatpush1.msra.mxu0 0.0
    %353 = vmatprep.subr.mxu0 0.0
    %354 = vmatpush1.msra.mxu0 0.0
    %355 = vmatprep.subr.mxu0 0.0
    %356 = vmatpush1.msra.mxu0 0.0
    %357 = vmatprep.mubr.f32.mxu0 0.0
    %358 = vmatmul.mubr.f32.gmra.mrb[0].mxu0 %v290
    %v359 = vpop.f32.mrb[0].mxu0
    %v360 = vadd.f32 %v292, %v359
    %v361 = vpop.f32.mrb[0].mxu0
    %362 = vdwg.mxu0
    %v363 = vtanh.pop %v360
    %364 = vst [vmem:[#allocation2] sm:$0x3] %v363
    %s365 = scalar_lea.vmem [#allocation8], 6
    %366 = vst [vmem:[%s365] sm:$0x3] %v363
    %v367 = vld [vmem:[#allocation2] sm:$0x3]
    %s368 = scalar_lea.vmem [#allocation3], 8
    %v369 = vld [vmem:[%s368] sm:$0x3]
    %370 = vmatprep.subr.mxu0 0.0
    %371 = vmatpush1.msra.mxu0 %v45
    %372 = vmatprep.subr.mxu0 0.0
    %373 = vmatpush1.msra.mxu0 %v46
    %374 = vmatprep.subr.mxu0 0.0
    %375 = vmatpush1.msra.mxu0 %v47
    %376 = vmatprep.subr.mxu0 0.0
    %377 = vmatpush1.msra.mxu0 %v48
    %378 = vmatprep.subr.mxu0 0.0
    %379 = vmatpush1.msra.mxu0 %v49
    %380 = vmatprep.subr.mxu0 0.0
    %381 = vmatpush1.msra.mxu0 %v50
    %382 = vmatprep.subr.mxu0 0.0
    %383 = vmatpush1.msra.mxu0 %v51
    %384 = vmatprep.subr.mxu0 0.0
    %385 = vmatpush1.msra.mxu0 %v52
    %386 = vmatprep.subr.mxu0 0.0
    %387 = vmatpush1.msra.mxu0 %v53
    %388 = vmatprep.subr.mxu0 0.0
    %389 = vmatpush1.msra.mxu0 %v54
    %390 = vmatprep.subr.mxu0 0.0
    %391 = vmatpush1.msra.mxu0 %v55
    %392 = vmatprep.subr.mxu0 0.0
    %393 = vmatpush1.msra.mxu0 %v56
    %394 = vmatprep.subr.mxu0 0.0
    %395 = vmatpush1.msra.mxu0 %v57
    %396 = vmatprep.subr.mxu0 0.0
    %397 = vmatpush1.msra.mxu0 %v58
    %398 = vmatprep.subr.mxu0 0.0
    %399 = vmatpush1.msra.mxu0 %v59
    %400 = vmatprep.subr.mxu0 0.0
    %401 = vmatpush1.msra.mxu0 %v60
    %402 = vmatprep.subr.mxu0 0.0
    %403 = vmatpush1.msra.mxu0 0.0
    %404 = vmatprep.subr.mxu0 0.0
    %405 = vmatpush1.msra.mxu0 0.0
    %406 = vmatprep.subr.mxu0 0.0
    %407 = vmatpush1.msra.mxu0 0.0
    %408 = vmatprep.subr.mxu0 0.0
    %409 = vmatpush1.msra.mxu0 0.0
    %410 = vmatprep.subr.mxu0 0.0
    %411 = vmatpush1.msra.mxu0 0.0
    %412 = vmatprep.subr.mxu0 0.0
    %413 = vmatpush1.msra.mxu0 0.0
    %414 = vmatprep.subr.mxu0 0.0
    %415 = vmatpush1.msra.mxu0 0.0
    %416 = vmatprep.subr.mxu0 0.0
    %417 = vmatpush1.msra.mxu0 0.0
    %418 = vmatprep.subr.mxu0 0.0
    %419 = vmatpush1.msra.mxu0 0.0
    %420 = vmatprep.subr.mxu0 0.0
    %421 = vmatpush1.msra.mxu0 0.0
    %422 = vmatprep.subr.mxu0 0.0
    %423 = vmatpush1.msra.mxu0 0.0
    %424 = vmatprep.subr.mxu0 0.0
    %425 = vmatpush1.msra.mxu0 0.0
    %426 = vmatprep.subr.mxu0 0.0
    %427 = vmatpush1.msra.mxu0 0.0
    %428 = vmatprep.subr.mxu0 0.0
    %429 = vmatpush1.msra.mxu0 0.0
    %430 = vmatprep.subr.mxu0 0.0
    %431 = vmatpush1.msra.mxu0 0.0
    %432 = vmatprep.subr.mxu0 0.0
    %433 = vmatpush1.msra.mxu0 0.0
    %434 = vmatprep.mubr.f32.mxu0 0.0
    %435 = vmatmul.mubr.f32.gmra.mrb[0].mxu0 %v367
    %v436 = vpop.f32.mrb[0].mxu0
    %v437 = vadd.f32 %v369, %v436
    %v438 = vpop.f32.mrb[0].mxu0
    %439 = vdwg.mxu0
    %v440 = vtanh.pop %v437
    %441 = vst [vmem:[#allocation2] sm:$0x3] %v440
    %s442 = scalar_lea.vmem [#allocation8], 8
    %443 = vst [vmem:[%s442] sm:$0x3] %v440
    %v444 = vld [vmem:[#allocation2] sm:$0x3]
    %s445 = scalar_lea.vmem [#allocation3], 10
    %v446 = vld [vmem:[%s445] sm:$0x3]
    %447 = vmatprep.subr.mxu0 0.0
    %448 = vmatpush1.msra.mxu0 %v45
    %449 = vmatprep.subr.mxu0 0.0
    %450 = vmatpush1.msra.mxu0 %v46
    %451 = vmatprep.subr.mxu0 0.0
    %452 = vmatpush1.msra.mxu0 %v47
    %453 = vmatprep.subr.mxu0 0.0
    %454 = vmatpush1.msra.mxu0 %v48
    %455 = vmatprep.subr.mxu0 0.0
    %456 = vmatpush1.msra.mxu0 %v49
    %457 = vmatprep.subr.mxu0 0.0
    %458 = vmatpush1.msra.mxu0 %v50
    %459 = vmatprep.subr.mxu0 0.0
    %460 = vmatpush1.msra.mxu0 %v51
    %461 = vmatprep.subr.mxu0 0.0
    %462 = vmatpush1.msra.mxu0 %v52
    %463 = vmatprep.subr.mxu0 0.0
    %464 = vmatpush1.msra.mxu0 %v53
    %465 = vmatprep.subr.mxu0 0.0
    %466 = vmatpush1.msra.mxu0 %v54
    %467 = vmatprep.subr.mxu0 0.0
    %468 = vmatpush1.msra.mxu0 %v55
    %469 = vmatprep.subr.mxu0 0.0
    %470 = vmatpush1.msra.mxu0 %v56
    %471 = vmatprep.subr.mxu0 0.0
    %472 = vmatpush1.msra.mxu0 %v57
    %473 = vmatprep.subr.mxu0 0.0
    %474 = vmatpush1.msra.mxu0 %v58
    %475 = vmatprep.subr.mxu0 0.0
    %476 = vmatpush1.msra.mxu0 %v59
    %477 = vmatprep.subr.mxu0 0.0
    %478 = vmatpush1.msra.mxu0 %v60
    %479 = vmatprep.subr.mxu0 0.0
    %480 = vmatpush1.msra.mxu0 0.0
    %481 = vmatprep.subr.mxu0 0.0
    %482 = vmatpush1.msra.mxu0 0.0
    %483 = vmatprep.subr.mxu0 0.0
    %484 = vmatpush1.msra.mxu0 0.0
    %485 = vmatprep.subr.mxu0 0.0
    %486 = vmatpush1.msra.mxu0 0.0
    %487 = vmatprep.subr.mxu0 0.0
    %488 = vmatpush1.msra.mxu0 0.0
    %489 = vmatprep.subr.mxu0 0.0
    %490 = vmatpush1.msra.mxu0 0.0
    %491 = vmatprep.subr.mxu0 0.0
    %492 = vmatpush1.msra.mxu0 0.0
    %493 = vmatprep.subr.mxu0 0.0
    %494 = vmatpush1.msra.mxu0 0.0
    %495 = vmatprep.subr.mxu0 0.0
    %496 = vmatpush1.msra.mxu0 0.0
    %497 = vmatprep.subr.mxu0 0.0
    %498 = vmatpush1.msra.mxu0 0.0
    %499 = vmatprep.subr.mxu0 0.0
    %500 = vmatpush1.msra.mxu0 0.0
    %501 = vmatprep.subr.mxu0 0.0
    %502 = vmatpush1.msra.mxu0 0.0
    %503 = vmatprep.subr.mxu0 0.0
    %504 = vmatpush1.msra.mxu0 0.0
    %505 = vmatprep.subr.mxu0 0.0
    %506 = vmatpush1.msra.mxu0 0.0
    %507 = vmatprep.subr.mxu0 0.0
    %508 = vmatpush1.msra.mxu0 0.0
    %509 = vmatprep.subr.mxu0 0.0
    %510 = vmatpush1.msra.mxu0 0.0
    %511 = vmatprep.mubr.f32.mxu0 0.0
    %512 = vmatmul.mubr.f32.gmra.mrb[0].mxu0 %v444
    %v513 = vpop.f32.mrb[0].mxu0
    %v514 = vadd.f32 %v446, %v513
    %v515 = vpop.f32.mrb[0].mxu0
    %516 = vdwg.mxu0
    %v517 = vtanh.pop %v514
    %518 = vst [vmem:[#allocation2] sm:$0x3] %v517
    %s519 = scalar_lea.vmem [#allocation8], 10
    %520 = vst [vmem:[%s519] sm:$0x3] %v517
    %v521 = vld [vmem:[#allocation2] sm:$0x3]
    %s522 = scalar_lea.vmem [#allocation3], 12
    %v523 = vld [vmem:[%s522] sm:$0x3]
    %524 = vmatprep.subr.mxu0 0.0
    %525 = vmatpush1.msra.mxu0 %v45
    %526 = vmatprep.subr.mxu0 0.0
    %527 = vmatpush1.msra.mxu0 %v46
    %528 = vmatprep.subr.mxu0 0.0
    %529 = vmatpush1.msra.mxu0 %v47
    %530 = vmatprep.subr.mxu0 0.0
    %531 = vmatpush1.msra.mxu0 %v48
    %532 = vmatprep.subr.mxu0 0.0
    %533 = vmatpush1.msra.mxu0 %v49
    %534 = vmatprep.subr.mxu0 0.0
    %535 = vmatpush1.msra.mxu0 %v50
    %536 = vmatprep.subr.mxu0 0.0
    %537 = vmatpush1.msra.mxu0 %v51
    %538 = vmatprep.subr.mxu0 0.0
    %539 = vmatpush1.msra.mxu0 %v52
    %540 = vmatprep.subr.mxu0 0.0
    %541 = vmatpush1.msra.mxu0 %v53
    %542 = vmatprep.subr.mxu0 0.0
    %543 = vmatpush1.msra.mxu0 %v54
    %544 = vmatprep.subr.mxu0 0.0
    %545 = vmatpush1.msra.mxu0 %v55
    %546 = vmatprep.subr.mxu0 0.0
    %547 = vmatpush1.msra.mxu0 %v56
    %548 = vmatprep.subr.mxu0 0.0
    %549 = vmatpush1.msra.mxu0 %v57
    %550 = vmatprep.subr.mxu0 0.0
    %551 = vmatpush1.msra.mxu0 %v58
    %552 = vmatprep.subr.mxu0 0.0
    %553 = vmatpush1.msra.mxu0 %v59
    %554 = vmatprep.subr.mxu0 0.0
    %555 = vmatpush1.msra.mxu0 %v60
    %556 = vmatprep.subr.mxu0 0.0
    %557 = vmatpush1.msra.mxu0 0.0
    %558 = vmatprep.subr.mxu0 0.0
    %559 = vmatpush1.msra.mxu0 0.0
    %560 = vmatprep.subr.mxu0 0.0
    %561 = vmatpush1.msra.mxu0 0.0
    %562 = vmatprep.subr.mxu0 0.0
    %563 = vmatpush1.msra.mxu0 0.0
    %564 = vmatprep.subr.mxu0 0.0
    %565 = vmatpush1.msra.mxu0 0.0
    %566 = vmatprep.subr.mxu0 0.0
    %567 = vmatpush1.msra.mxu0 0.0
    %568 = vmatprep.subr.mxu0 0.0
    %569 = vmatpush1.msra.mxu0 0.0
    %570 = vmatprep.subr.mxu0 0.0
    %571 = vmatpush1.msra.mxu0 0.0
    %572 = vmatprep.subr.mxu0 0.0
    %573 = vmatpush1.msra.mxu0 0.0
    %574 = vmatprep.subr.mxu0 0.0
    %575 = vmatpush1.msra.mxu0 0.0
    %576 = vmatprep.subr.mxu0 0.0
    %577 = vmatpush1.msra.mxu0 0.0
    %578 = vmatprep.subr.mxu0 0.0
    %579 = vmatpush1.msra.mxu0 0.0
    %580 = vmatprep.subr.mxu0 0.0
    %581 = vmatpush1.msra.mxu0 0.0
    %582 = vmatprep.subr.mxu0 0.0
    %583 = vmatpush1.msra.mxu0 0.0
    %584 = vmatprep.subr.mxu0 0.0
    %585 = vmatpush1.msra.mxu0 0.0
    %586 = vmatprep.subr.mxu0 0.0
    %587 = vmatpush1.msra.mxu0 0.0
    %588 = vmatprep.mubr.f32.mxu0 0.0
    %589 = vmatmul.mubr.f32.gmra.mrb[0].mxu0 %v521
    %v590 = vpop.f32.mrb[0].mxu0
    %v591 = vadd.f32 %v523, %v590
    %v592 = vpop.f32.mrb[0].mxu0
    %593 = vdwg.mxu0
    %v594 = vtanh.pop %v591
    %595 = vst [vmem:[#allocation2] sm:$0x3] %v594
    %s596 = scalar_lea.vmem [#allocation8], 12
    %597 = vst [vmem:[%s596] sm:$0x3] %v594
    %v598 = vld [vmem:[#allocation2] sm:$0x3]
    %s599 = scalar_lea.vmem [#allocation3], 14
    %v600 = vld [vmem:[%s599] sm:$0x3]
    %601 = vmatprep.subr.mxu0 0.0
    %602 = vmatpush1.msra.mxu0 %v45
    %603 = vmatprep.subr.mxu0 0.0
    %604 = vmatpush1.msra.mxu0 %v46
    %605 = vmatprep.subr.mxu0 0.0
    %606 = vmatpush1.msra.mxu0 %v47
    %607 = vmatprep.subr.mxu0 0.0
    %608 = vmatpush1.msra.mxu0 %v48
    %609 = vmatprep.subr.mxu0 0.0
    %610 = vmatpush1.msra.mxu0 %v49
    %611 = vmatprep.subr.mxu0 0.0
    %612 = vmatpush1.msra.mxu0 %v50
    %613 = vmatprep.subr.mxu0 0.0
    %614 = vmatpush1.msra.mxu0 %v51
    %615 = vmatprep.subr.mxu0 0.0
    %616 = vmatpush1.msra.mxu0 %v52
    %617 = vmatprep.subr.mxu0 0.0
    %618 = vmatpush1.msra.mxu0 %v53
    %619 = vmatprep.subr.mxu0 0.0
    %620 = vmatpush1.msra.mxu0 %v54
    %621 = vmatprep.subr.mxu0 0.0
    %622 = vmatpush1.msra.mxu0 %v55
    %623 = vmatprep.subr.mxu0 0.0
    %624 = vmatpush1.msra.mxu0 %v56
    %625 = vmatprep.subr.mxu0 0.0
    %626 = vmatpush1.msra.mxu0 %v57
    %627 = vmatprep.subr.mxu0 0.0
    %628 = vmatpush1.msra.mxu0 %v58
    %629 = vmatprep.subr.mxu0 0.0
    %630 = vmatpush1.msra.mxu0 %v59
    %631 = vmatprep.subr.mxu0 0.0
    %632 = vmatpush1.msra.mxu0 %v60
    %633 = vmatprep.subr.mxu0 0.0
    %634 = vmatpush1.msra.mxu0 0.0
    %635 = vmatprep.subr.mxu0 0.0
    %636 = vmatpush1.msra.mxu0 0.0
    %637 = vmatprep.subr.mxu0 0.0
    %638 = vmatpush1.msra.mxu0 0.0
    %639 = vmatprep.subr.mxu0 0.0
    %640 = vmatpush1.msra.mxu0 0.0
    %641 = vmatprep.subr.mxu0 0.0
    %642 = vmatpush1.msra.mxu0 0.0
    %643 = vmatprep.subr.mxu0 0.0
    %644 = vmatpush1.msra.mxu0 0.0
    %645 = vmatprep.subr.mxu0 0.0
    %646 = vmatpush1.msra.mxu0 0.0
    %647 = vmatprep.subr.mxu0 0.0
    %648 = vmatpush1.msra.mxu0 0.0
    %649 = vmatprep.subr.mxu0 0.0
    %650 = vmatpush1.msra.mxu0 0.0
    %651 = vmatprep.subr.mxu0 0.0
    %652 = vmatpush1.msra.mxu0 0.0
    %653 = vmatprep.subr.mxu0 0.0
    %654 = vmatpush1.msra.mxu0 0.0
    %655 = vmatprep.subr.mxu0 0.0
    %656 = vmatpush1.msra.mxu0 0.0
    %657 = vmatprep.subr.mxu0 0.0
    %658 = vmatpush1.msra.mxu0 0.0
    %659 = vmatprep.subr.mxu0 0.0
    %660 = vmatpush1.msra.mxu0 0.0
    %661 = vmatprep.subr.mxu0 0.0
    %662 = vmatpush1.msra.mxu0 0.0
    %663 = vmatprep.subr.mxu0 0.0
    %664 = vmatpush1.msra.mxu0 0.0
    %665 = vmatprep.mubr.f32.mxu0 0.0
    %666 = vmatmul.mubr.f32.gmra.mrb[0].mxu0 %v598
    %v667 = vpop.f32.mrb[0].mxu0
    %v668 = vadd.f32 %v600, %v667
    %v669 = vpop.f32.mrb[0].mxu0
    %670 = vdwg.mxu0
    %v671 = vtanh.pop %v668
    %672 = vst [vmem:[#allocation2] sm:$0x3] %v671
    %s673 = scalar_lea.vmem [#allocation8], 14
    %674 = vst [vmem:[%s673] sm:$0x3] %v671
    // Predicated region
    $region22: #{tpu_custom_call.1} parent=1 // pred_check
      _
    $region23: #{tpu_custom_call.1} parent=1 // pred_check_branch
      %676 = sbr.rel (0) target = $region25
    $region24: #{tpu_custom_call.1} parent=1 // pred_region
      %s678 = ssub.s32 256, 256
      %679 = vsyncadd [#allocation5], %s678
      %s680 = sshll.u32 [#allocation8], 4
      %s681 = int_to_ptr.vmem [resolvable:$true] %s680
      %686 = dma.vmem_to_hbm [thread:$0]  %s681, 256, %s2, [#allocation5], 32, 32, 2
    $region25: #{tpu_custom_call.1} parent=1 // pred_fallthru
      _
    // Predicated region
    $region26: #{tpu_custom_call.1} parent=1 // pred_check
      _
    $region27: #{tpu_custom_call.1} parent=1 // pred_check_branch
      %688 = sbr.rel (0) target = $region29
    $region28: #{tpu_custom_call.1} parent=1 // pred_region
      %689 = dma.done [#allocation5], 256
    $region29: #{tpu_custom_call.1} parent=1 // pred_fallthru
      _
    %690 = vsyncpa [#allocation4], 1
    %691 = vsyncpa [#allocation7], 1
    %692 = vsyncpa [#allocation5], 1

</llo_original>
